<compile_context>
chip_gen: v7x
topology: tpu7x:2x2x1
jax: 0.10.0
libtpu: 0.0.40
codegen_flags: <defaults>
</compile_context>

<pallas_src>
import functools

import jax
import jax.numpy as jnp
from jax.experimental import pallas as pl
from jax.experimental.pallas import tpu as pltpu


def _round_up(x, m):
    return (x + m - 1) // m * m


def _bilstm_kernel(sent_ref,                     # SMEM (T_pad,) int32  (scalar prefetch)
                   embed_hbm,                    # HBM  (V, E) f32      (pl.ANY)
                   wih_ref, bih_ref,             # VMEM (E, 6H) bf16, (1, 6H) f32
                   wtag_ref, btag_ref,           # VMEM (2H, KP) bf16, (1, KP) f32
                   out_ref,                      # VMEM (TM, KP) f32
                   x_buf, sems,                  # scratch: VMEM (TM, E) f32, DMA sems (TM,)
                   *, hidden, block_t):
    H2 = 2 * hidden
    base = pl.program_id(0) * block_t
    unroll = block_t <= 16

    # ---- fused embedding gather: one row DMA per token in this block -------
    def start_row(r, carry):
        tok = sent_ref[base + r]
        pltpu.make_async_copy(embed_hbm.at[pl.ds(tok, 1), :],
                              x_buf.at[pl.ds(r, 1), :],
                              sems.at[r]).start()
        return carry

    jax.lax.fori_loop(0, block_t, start_row, 0, unroll=unroll)

    def wait_row(r, carry):
        pltpu.make_async_copy(embed_hbm.at[pl.ds(0, 1), :],
                              x_buf.at[pl.ds(r, 1), :],
                              sems.at[r]).wait()
        return carry

    jax.lax.fori_loop(0, block_t, wait_row, 0, unroll=unroll)

    # ---- LSTM cell gates: single bf16 MXU pass, f32 accumulation -----------
    x = x_buf[...].astype(jnp.bfloat16)                              # (TM, E)
    gates = jnp.dot(x, wih_ref[...],
                    preferred_element_type=jnp.float32) + bih_ref[...]  # (TM, 6H) f32

    # column layout: [i_fwd | i_bwd | g_fwd | g_bwd | o_fwd | o_bwd]
    i = jax.nn.sigmoid(gates[:, 0 * H2:1 * H2])                      # (TM, 2H)
    g = jnp.tanh(gates[:, 1 * H2:2 * H2])                            # (TM, 2H)
    o = jax.nn.sigmoid(gates[:, 2 * H2:3 * H2])                      # (TM, 2H)
    h = o * jnp.tanh(i * g)                                          # = [h_fwd | h_bwd]

    # ---- hidden2tag projection (lane-padded to KP) + log_softmax -----------
    feats = jnp.dot(h.astype(jnp.bfloat16), wtag_ref[...],
                    preferred_element_type=jnp.float32) + btag_ref[...]  # (TM, KP)

    m = jnp.max(feats, axis=-1, keepdims=True)
    s = feats - m
    lse = jnp.log(jnp.sum(jnp.exp(s), axis=-1, keepdims=True))
    out_ref[...] = s - lse


def bilstm_forward(sentence, params, *, block_t=None):
    """Forward pass.  Everything (embedding gather, LSTM-cell gates, tag
    projection, log_softmax) runs inside the Pallas kernel."""
    T = sentence.shape[0]
    H = params["hidden_size"]
    K = params["tag_size"]
    E = params["embed"].shape[1]
    KP = params["w_tag"].shape[1]                 # lane-padded tag dim (128)

    if block_t is None:
        block_t = min(256, _round_up(T, 8))
    T_pad = _round_up(T, block_t)

    sent = sentence.astype(jnp.int32)
    if T_pad != T:
        sent = jnp.concatenate([sent, jnp.zeros((T_pad - T,), jnp.int32)])

    kernel = functools.partial(_bilstm_kernel, hidden=H, block_t=block_t)

    grid_spec = pltpu.PrefetchScalarGridSpec(
        num_scalar_prefetch=1,
        grid=(T_pad // block_t,),
        in_specs=[
            pl.BlockSpec(memory_space=pl.ANY),                      # embed table (HBM)
            pl.BlockSpec((E, 6 * H), lambda i, s: (0, 0)),          # w_ih  (VMEM resident)
            pl.BlockSpec((1, 6 * H), lambda i, s: (0, 0)),          # b_ih
            pl.BlockSpec((2 * H, KP), lambda i, s: (0, 0)),         # w_tag
            pl.BlockSpec((1, KP), lambda i, s: (0, 0)),             # b_tag
        ],
        out_specs=pl.BlockSpec((block_t, KP), lambda i, s: (i, 0)),
        scratch_shapes=[
            pltpu.VMEM((block_t, E), jnp.float32),                  # gathered embeddings
            pltpu.SemaphoreType.DMA((block_t,)),
        ],
    )

    out = pl.pallas_call(
        kernel,
        out_shape=jax.ShapeDtypeStruct((T_pad, KP), jnp.float32),
        grid_spec=grid_spec,
        compiler_params=pltpu.CompilerParams(
            dimension_semantics=("parallel",)),                     # v7x: 2 TCs split blocks
    )(sent, params["embed"], params["w_ih"], params["b_ih"],
      params["w_tag"], params["b_tag"])

    return out[:T, :K]


def make_params(key, vocab_size, embed_size, hidden_size, tag_size):
    """Deterministic synthetic parameters matching the PyTorch module's shapes,
    pre-packed into the kernel-friendly layout."""
    E, H, K = embed_size, hidden_size, tag_size
    ks = jax.random.split(key, 8)

    embed = jax.random.uniform(ks[0], (vocab_size, E), jnp.float32, -0.1, 0.1)

    # nn.LSTM(E, H, bidirectional=True): per direction weight_ih (4H, E) with
    # gate row-order [i, f, g, o]; bias_ih + bias_hh (4H,).  weight_hh is
    # unused (zero initial hidden state, seq_len == 1); the forget gate is
    # dead (zero initial cell state) and is dropped from the packed weight.
    def lstm_dir(k):
        k1, k2, k3 = jax.random.split(k, 3)
        w_ih = jax.random.uniform(k1, (4 * H, E), jnp.float32, -0.1, 0.1)
        b_ih = jax.random.uniform(k2, (4 * H,), jnp.float32, -0.1, 0.1)
        b_hh = jax.random.uniform(k3, (4 * H,), jnp.float32, -0.1, 0.1)
        return w_ih, b_ih + b_hh

    w_f, b_f = lstm_dir(ks[1])
    w_b, b_b = lstm_dir(ks[2])

    def wgate(w, j):
        return w[j * H:(j + 1) * H, :]

    def bgate(b, j):
        return b[j * H:(j + 1) * H]

    # Column order: [i_fwd | i_bwd | g_fwd | g_bwd | o_fwd | o_bwd]  -> (E, 6H)
    w_ih = jnp.concatenate([wgate(w_f, 0), wgate(w_b, 0),
                            wgate(w_f, 2), wgate(w_b, 2),
                            wgate(w_f, 3), wgate(w_b, 3)], axis=0).T
    b_ih = jnp.concatenate([bgate(b_f, 0), bgate(b_b, 0),
                            bgate(b_f, 2), bgate(b_b, 2),
                            bgate(b_f, 3), bgate(b_b, 3)])[None, :]

    # hidden2tag: Linear(2H, K): weight (K, 2H), bias (K).  Pre-transpose and
    # lane-pad the tag dim to 128 for lane-dense output stores; padded bias
    # columns get -1e30 so they vanish under log_softmax.
    w_tag = jax.random.uniform(ks[3], (K, 2 * H), jnp.float32, -0.1, 0.1)
    b_tag = jax.random.uniform(ks[4], (K,), jnp.float32, -0.1, 0.1)
    KP = max(128, _round_up(K, 128))
    w_tag_p = jnp.zeros((2 * H, KP), jnp.float32).at[:, :K].set(w_tag.T)
    b_tag_p = jnp.full((1, KP), -1e30, jnp.float32).at[0, :K].set(b_tag)

    return {
        "embed": embed,                                    # f32 (V, E), stays in HBM
        "w_ih": w_ih.astype(jnp.bfloat16),                 # (E, 6H)
        "b_ih": b_ih,                                      # (1, 6H) f32
        "w_tag": w_tag_p.astype(jnp.bfloat16),             # (2H, KP)
        "b_tag": b_tag_p,                                  # (1, KP) f32
        "hidden_size": H,
        "tag_size": K,
    }


def reference_forward(sentence, params):
    """Pure-JAX f32 reference (uses the same stored weights, upcast)."""
    H = params["hidden_size"]
    K = params["tag_size"]
    H2 = 2 * H
    x = params["embed"][sentence]
    gates = x @ params["w_ih"].astype(jnp.float32) + params["b_ih"]
    i = jax.nn.sigmoid(gates[:, 0 * H2:1 * H2])
    g = jnp.tanh(gates[:, 1 * H2:2 * H2])
    o = jax.nn.sigmoid(gates[:, 2 * H2:3 * H2])
    h = o * jnp.tanh(i * g)
    feats = h @ params["w_tag"].astype(jnp.float32)[:, :K] + params["b_tag"][:, :K]
    return jax.nn.log_softmax(feats, axis=-1)


if __name__ == "__main__":
    vocab_size = 50
    embed_size = 32
    hidden_size = 32
    tag_size = 8          # len(tag2id)
    seq_len = 8

    key = jax.random.PRNGKey(0)
    k_param, k_sent = jax.random.split(key)
    params = make_params(k_param, vocab_size, embed_size, hidden_size, tag_size)
    sentence = jax.random.randint(k_sent, (seq_len,), 0, vocab_size, dtype=jnp.int32)

    score = bilstm_forward(sentence, params)
    score = jax.block_until_ready(score)

    ref = reference_forward(sentence, params)
    assert score.shape == (seq_len, tag_size)
    # bf16 matmul inputs (f32 accumulation) vs f32 reference: loosened tolerance.
    assert jnp.allclose(score, ref, atol=2e-3, rtol=2e-3), float(
        jnp.max(jnp.abs(score - ref)))

    print("KERNEL_OK")
</pallas_src>

<mosaic_0001>
module attributes {stable_mosaic.version = 11 : i64} {
  func.func @_bilstm_kernel(%arg0: i32, %arg1: memref<8xi32, #tpu.memory_space<smem>>, %arg2: memref<50x32xf32, #tpu.memory_space<any>>, %arg3: memref<32x192xbf16, #tpu.memory_space<vmem>>, %arg4: memref<1x192xf32, #tpu.memory_space<vmem>>, %arg5: memref<64x128xbf16, #tpu.memory_space<vmem>>, %arg6: memref<1x128xf32, #tpu.memory_space<vmem>>, %arg7: memref<8x128xf32, #tpu.memory_space<vmem>>, %arg8: memref<8x32xf32, #tpu.memory_space<vmem>>, %arg9: memref<8x!tpu.dma_semaphore, #tpu.memory_space<semaphore_mem>>) attributes {dimension_semantics = [#tpu.dimension_semantics<parallel>], iteration_bounds = array<i64: 1>, scalar_prefetch = 1 : i64, scratch_operands = 2 : i64, tpu.core_type = #tpu.core_type<tc>, window_params = [{}, {pipeline_mode = #tpu.pipeline_mode<synchronous>, transform_indices = @transform_1, window_bounds = array<i64: 32, 192>}, {pipeline_mode = #tpu.pipeline_mode<synchronous>, transform_indices = @transform_2, window_bounds = array<i64: 1, 192>}, {pipeline_mode = #tpu.pipeline_mode<synchronous>, transform_indices = @transform_3, window_bounds = array<i64: 64, 128>}, {pipeline_mode = #tpu.pipeline_mode<synchronous>, transform_indices = @transform_4, window_bounds = array<i64: 1, 128>}, {transform_indices = @transform_5, window_bounds = array<i64: 8, 128>}]} {
    %c8_i32 = arith.constant 8 : i32
    %0 = arith.muli %arg0, %c8_i32 : i32
    %c0_i32 = arith.constant 0 : i32
    %1 = arith.addi %0, %c0_i32 : i32
    %2 = arith.index_cast %1 : i32 to index
    %3 = memref.load %arg1[%2] : memref<8xi32, #tpu.memory_space<smem>>
    %c0_i32_0 = arith.constant 0 : i32
    %4 = tpu.memref_slice %arg2[%3, %c0_i32_0] : memref<50x32xf32, #tpu.memory_space<any>> -> memref<1x32xf32, #tpu.memory_space<any>>
    %c0_i32_1 = arith.constant 0 : i32
    %5 = tpu.memref_slice %arg8[%c0_i32, %c0_i32_1] : memref<8x32xf32, #tpu.memory_space<vmem>> -> memref<1x32xf32, #tpu.memory_space<vmem>>
    %6 = tpu.memref_slice %arg9[%c0_i32] : memref<8x!tpu.dma_semaphore, #tpu.memory_space<semaphore_mem>> -> memref<1x!tpu.dma_semaphore, #tpu.memory_space<semaphore_mem>>
    %7 = tpu.memref_squeeze %6 : memref<1x!tpu.dma_semaphore, #tpu.memory_space<semaphore_mem>> -> memref<!tpu.dma_semaphore, #tpu.memory_space<semaphore_mem>>
    tpu.enqueue_dma source(%4 : memref<1x32xf32, #tpu.memory_space<any>>) target(%5 : memref<1x32xf32, #tpu.memory_space<vmem>>) target_semaphore(%7 : memref<!tpu.dma_semaphore, #tpu.memory_space<semaphore_mem>>)
    %c1_i32 = arith.constant 1 : i32
    %8 = arith.addi %0, %c1_i32 : i32
    %9 = arith.index_cast %8 : i32 to index
    %10 = memref.load %arg1[%9] : memref<8xi32, #tpu.memory_space<smem>>
    %c0_i32_2 = arith.constant 0 : i32
    %11 = tpu.memref_slice %arg2[%10, %c0_i32_2] : memref<50x32xf32, #tpu.memory_space<any>> -> memref<1x32xf32, #tpu.memory_space<any>>
    %c0_i32_3 = arith.constant 0 : i32
    %12 = tpu.memref_slice %arg8[%c1_i32, %c0_i32_3] : memref<8x32xf32, #tpu.memory_space<vmem>> -> memref<1x32xf32, #tpu.memory_space<vmem>>
    %13 = tpu.memref_slice %arg9[%c1_i32] : memref<8x!tpu.dma_semaphore, #tpu.memory_space<semaphore_mem>> -> memref<1x!tpu.dma_semaphore, #tpu.memory_space<semaphore_mem>>
    %14 = tpu.memref_squeeze %13 : memref<1x!tpu.dma_semaphore, #tpu.memory_space<semaphore_mem>> -> memref<!tpu.dma_semaphore, #tpu.memory_space<semaphore_mem>>
    tpu.enqueue_dma source(%11 : memref<1x32xf32, #tpu.memory_space<any>>) target(%12 : memref<1x32xf32, #tpu.memory_space<vmem>>) target_semaphore(%14 : memref<!tpu.dma_semaphore, #tpu.memory_space<semaphore_mem>>)
    %c2_i32 = arith.constant 2 : i32
    %15 = arith.addi %0, %c2_i32 : i32
    %16 = arith.index_cast %15 : i32 to index
    %17 = memref.load %arg1[%16] : memref<8xi32, #tpu.memory_space<smem>>
    %c0_i32_4 = arith.constant 0 : i32
    %18 = tpu.memref_slice %arg2[%17, %c0_i32_4] : memref<50x32xf32, #tpu.memory_space<any>> -> memref<1x32xf32, #tpu.memory_space<any>>
    %c0_i32_5 = arith.constant 0 : i32
    %19 = tpu.memref_slice %arg8[%c2_i32, %c0_i32_5] : memref<8x32xf32, #tpu.memory_space<vmem>> -> memref<1x32xf32, #tpu.memory_space<vmem>>
    %20 = tpu.memref_slice %arg9[%c2_i32] : memref<8x!tpu.dma_semaphore, #tpu.memory_space<semaphore_mem>> -> memref<1x!tpu.dma_semaphore, #tpu.memory_space<semaphore_mem>>
    %21 = tpu.memref_squeeze %20 : memref<1x!tpu.dma_semaphore, #tpu.memory_space<semaphore_mem>> -> memref<!tpu.dma_semaphore, #tpu.memory_space<semaphore_mem>>
    tpu.enqueue_dma source(%18 : memref<1x32xf32, #tpu.memory_space<any>>) target(%19 : memref<1x32xf32, #tpu.memory_space<vmem>>) target_semaphore(%21 : memref<!tpu.dma_semaphore, #tpu.memory_space<semaphore_mem>>)
    %c3_i32 = arith.constant 3 : i32
    %22 = arith.addi %0, %c3_i32 : i32
    %23 = arith.index_cast %22 : i32 to index
    %24 = memref.load %arg1[%23] : memref<8xi32, #tpu.memory_space<smem>>
    %c0_i32_6 = arith.constant 0 : i32
    %25 = tpu.memref_slice %arg2[%24, %c0_i32_6] : memref<50x32xf32, #tpu.memory_space<any>> -> memref<1x32xf32, #tpu.memory_space<any>>
    %c0_i32_7 = arith.constant 0 : i32
    %26 = tpu.memref_slice %arg8[%c3_i32, %c0_i32_7] : memref<8x32xf32, #tpu.memory_space<vmem>> -> memref<1x32xf32, #tpu.memory_space<vmem>>
    %27 = tpu.memref_slice %arg9[%c3_i32] : memref<8x!tpu.dma_semaphore, #tpu.memory_space<semaphore_mem>> -> memref<1x!tpu.dma_semaphore, #tpu.memory_space<semaphore_mem>>
    %28 = tpu.memref_squeeze %27 : memref<1x!tpu.dma_semaphore, #tpu.memory_space<semaphore_mem>> -> memref<!tpu.dma_semaphore, #tpu.memory_space<semaphore_mem>>
    tpu.enqueue_dma source(%25 : memref<1x32xf32, #tpu.memory_space<any>>) target(%26 : memref<1x32xf32, #tpu.memory_space<vmem>>) target_semaphore(%28 : memref<!tpu.dma_semaphore, #tpu.memory_space<semaphore_mem>>)
    %c4_i32 = arith.constant 4 : i32
    %29 = arith.addi %0, %c4_i32 : i32
    %30 = arith.index_cast %29 : i32 to index
    %31 = memref.load %arg1[%30] : memref<8xi32, #tpu.memory_space<smem>>
    %c0_i32_8 = arith.constant 0 : i32
    %32 = tpu.memref_slice %arg2[%31, %c0_i32_8] : memref<50x32xf32, #tpu.memory_space<any>> -> memref<1x32xf32, #tpu.memory_space<any>>
    %c0_i32_9 = arith.constant 0 : i32
    %33 = tpu.memref_slice %arg8[%c4_i32, %c0_i32_9] : memref<8x32xf32, #tpu.memory_space<vmem>> -> memref<1x32xf32, #tpu.memory_space<vmem>>
    %34 = tpu.memref_slice %arg9[%c4_i32] : memref<8x!tpu.dma_semaphore, #tpu.memory_space<semaphore_mem>> -> memref<1x!tpu.dma_semaphore, #tpu.memory_space<semaphore_mem>>
    %35 = tpu.memref_squeeze %34 : memref<1x!tpu.dma_semaphore, #tpu.memory_space<semaphore_mem>> -> memref<!tpu.dma_semaphore, #tpu.memory_space<semaphore_mem>>
    tpu.enqueue_dma source(%32 : memref<1x32xf32, #tpu.memory_space<any>>) target(%33 : memref<1x32xf32, #tpu.memory_space<vmem>>) target_semaphore(%35 : memref<!tpu.dma_semaphore, #tpu.memory_space<semaphore_mem>>)
    %c5_i32 = arith.constant 5 : i32
    %36 = arith.addi %0, %c5_i32 : i32
    %37 = arith.index_cast %36 : i32 to index
    %38 = memref.load %arg1[%37] : memref<8xi32, #tpu.memory_space<smem>>
    %c0_i32_10 = arith.constant 0 : i32
    %39 = tpu.memref_slice %arg2[%38, %c0_i32_10] : memref<50x32xf32, #tpu.memory_space<any>> -> memref<1x32xf32, #tpu.memory_space<any>>
    %c0_i32_11 = arith.constant 0 : i32
    %40 = tpu.memref_slice %arg8[%c5_i32, %c0_i32_11] : memref<8x32xf32, #tpu.memory_space<vmem>> -> memref<1x32xf32, #tpu.memory_space<vmem>>
    %41 = tpu.memref_slice %arg9[%c5_i32] : memref<8x!tpu.dma_semaphore, #tpu.memory_space<semaphore_mem>> -> memref<1x!tpu.dma_semaphore, #tpu.memory_space<semaphore_mem>>
    %42 = tpu.memref_squeeze %41 : memref<1x!tpu.dma_semaphore, #tpu.memory_space<semaphore_mem>> -> memref<!tpu.dma_semaphore, #tpu.memory_space<semaphore_mem>>
    tpu.enqueue_dma source(%39 : memref<1x32xf32, #tpu.memory_space<any>>) target(%40 : memref<1x32xf32, #tpu.memory_space<vmem>>) target_semaphore(%42 : memref<!tpu.dma_semaphore, #tpu.memory_space<semaphore_mem>>)
    %c6_i32 = arith.constant 6 : i32
    %43 = arith.addi %0, %c6_i32 : i32
    %44 = arith.index_cast %43 : i32 to index
    %45 = memref.load %arg1[%44] : memref<8xi32, #tpu.memory_space<smem>>
    %c0_i32_12 = arith.constant 0 : i32
    %46 = tpu.memref_slice %arg2[%45, %c0_i32_12] : memref<50x32xf32, #tpu.memory_space<any>> -> memref<1x32xf32, #tpu.memory_space<any>>
    %c0_i32_13 = arith.constant 0 : i32
    %47 = tpu.memref_slice %arg8[%c6_i32, %c0_i32_13] : memref<8x32xf32, #tpu.memory_space<vmem>> -> memref<1x32xf32, #tpu.memory_space<vmem>>
    %48 = tpu.memref_slice %arg9[%c6_i32] : memref<8x!tpu.dma_semaphore, #tpu.memory_space<semaphore_mem>> -> memref<1x!tpu.dma_semaphore, #tpu.memory_space<semaphore_mem>>
    %49 = tpu.memref_squeeze %48 : memref<1x!tpu.dma_semaphore, #tpu.memory_space<semaphore_mem>> -> memref<!tpu.dma_semaphore, #tpu.memory_space<semaphore_mem>>
    tpu.enqueue_dma source(%46 : memref<1x32xf32, #tpu.memory_space<any>>) target(%47 : memref<1x32xf32, #tpu.memory_space<vmem>>) target_semaphore(%49 : memref<!tpu.dma_semaphore, #tpu.memory_space<semaphore_mem>>)
    %c7_i32 = arith.constant 7 : i32
    %50 = arith.addi %0, %c7_i32 : i32
    %51 = arith.index_cast %50 : i32 to index
    %52 = memref.load %arg1[%51] : memref<8xi32, #tpu.memory_space<smem>>
    %c0_i32_14 = arith.constant 0 : i32
    %53 = tpu.memref_slice %arg2[%52, %c0_i32_14] : memref<50x32xf32, #tpu.memory_space<any>> -> memref<1x32xf32, #tpu.memory_space<any>>
    %c0_i32_15 = arith.constant 0 : i32
    %54 = tpu.memref_slice %arg8[%c7_i32, %c0_i32_15] : memref<8x32xf32, #tpu.memory_space<vmem>> -> memref<1x32xf32, #tpu.memory_space<vmem>>
    %55 = tpu.memref_slice %arg9[%c7_i32] : memref<8x!tpu.dma_semaphore, #tpu.memory_space<semaphore_mem>> -> memref<1x!tpu.dma_semaphore, #tpu.memory_space<semaphore_mem>>
    %56 = tpu.memref_squeeze %55 : memref<1x!tpu.dma_semaphore, #tpu.memory_space<semaphore_mem>> -> memref<!tpu.dma_semaphore, #tpu.memory_space<semaphore_mem>>
    tpu.enqueue_dma source(%53 : memref<1x32xf32, #tpu.memory_space<any>>) target(%54 : memref<1x32xf32, #tpu.memory_space<vmem>>) target_semaphore(%56 : memref<!tpu.dma_semaphore, #tpu.memory_space<semaphore_mem>>)
    %c8_i32_16 = arith.constant 8 : i32
    %c0_i32_17 = arith.constant 0 : i32
    %c0_i32_18 = arith.constant 0 : i32
    %c0_i32_19 = arith.constant 0 : i32
    %57 = tpu.memref_slice %arg2[%c0_i32_18, %c0_i32_19] : memref<50x32xf32, #tpu.memory_space<any>> -> memref<1x32xf32, #tpu.memory_space<any>>
    %c0_i32_20 = arith.constant 0 : i32
    %58 = tpu.memref_slice %arg8[%c0_i32_17, %c0_i32_20] : memref<8x32xf32, #tpu.memory_space<vmem>> -> memref<1x32xf32, #tpu.memory_space<vmem>>
    %59 = tpu.memref_slice %arg9[%c0_i32_17] : memref<8x!tpu.dma_semaphore, #tpu.memory_space<semaphore_mem>> -> memref<1x!tpu.dma_semaphore, #tpu.memory_space<semaphore_mem>>
    %60 = tpu.memref_squeeze %59 : memref<1x!tpu.dma_semaphore, #tpu.memory_space<semaphore_mem>> -> memref<!tpu.dma_semaphore, #tpu.memory_space<semaphore_mem>>
    tpu.wait_dma2 semaphore(%60 : memref<!tpu.dma_semaphore, #tpu.memory_space<semaphore_mem>>) src(%57 : memref<1x32xf32, #tpu.memory_space<any>>) dst(%58 : memref<1x32xf32, #tpu.memory_space<vmem>>)
    %c1_i32_21 = arith.constant 1 : i32
    %c0_i32_22 = arith.constant 0 : i32
    %c0_i32_23 = arith.constant 0 : i32
    %61 = tpu.memref_slice %arg2[%c0_i32_22, %c0_i32_23] : memref<50x32xf32, #tpu.memory_space<any>> -> memref<1x32xf32, #tpu.memory_space<any>>
    %c0_i32_24 = arith.constant 0 : i32
    %62 = tpu.memref_slice %arg8[%c1_i32_21, %c0_i32_24] : memref<8x32xf32, #tpu.memory_space<vmem>> -> memref<1x32xf32, #tpu.memory_space<vmem>>
    %63 = tpu.memref_slice %arg9[%c1_i32_21] : memref<8x!tpu.dma_semaphore, #tpu.memory_space<semaphore_mem>> -> memref<1x!tpu.dma_semaphore, #tpu.memory_space<semaphore_mem>>
    %64 = tpu.memref_squeeze %63 : memref<1x!tpu.dma_semaphore, #tpu.memory_space<semaphore_mem>> -> memref<!tpu.dma_semaphore, #tpu.memory_space<semaphore_mem>>
    tpu.wait_dma2 semaphore(%64 : memref<!tpu.dma_semaphore, #tpu.memory_space<semaphore_mem>>) src(%61 : memref<1x32xf32, #tpu.memory_space<any>>) dst(%62 : memref<1x32xf32, #tpu.memory_space<vmem>>)
    %c2_i32_25 = arith.constant 2 : i32
    %c0_i32_26 = arith.constant 0 : i32
    %c0_i32_27 = arith.constant 0 : i32
    %65 = tpu.memref_slice %arg2[%c0_i32_26, %c0_i32_27] : memref<50x32xf32, #tpu.memory_space<any>> -> memref<1x32xf32, #tpu.memory_space<any>>
    %c0_i32_28 = arith.constant 0 : i32
    %66 = tpu.memref_slice %arg8[%c2_i32_25, %c0_i32_28] : memref<8x32xf32, #tpu.memory_space<vmem>> -> memref<1x32xf32, #tpu.memory_space<vmem>>
    %67 = tpu.memref_slice %arg9[%c2_i32_25] : memref<8x!tpu.dma_semaphore, #tpu.memory_space<semaphore_mem>> -> memref<1x!tpu.dma_semaphore, #tpu.memory_space<semaphore_mem>>
    %68 = tpu.memref_squeeze %67 : memref<1x!tpu.dma_semaphore, #tpu.memory_space<semaphore_mem>> -> memref<!tpu.dma_semaphore, #tpu.memory_space<semaphore_mem>>
    tpu.wait_dma2 semaphore(%68 : memref<!tpu.dma_semaphore, #tpu.memory_space<semaphore_mem>>) src(%65 : memref<1x32xf32, #tpu.memory_space<any>>) dst(%66 : memref<1x32xf32, #tpu.memory_space<vmem>>)
    %c3_i32_29 = arith.constant 3 : i32
    %c0_i32_30 = arith.constant 0 : i32
    %c0_i32_31 = arith.constant 0 : i32
    %69 = tpu.memref_slice %arg2[%c0_i32_30, %c0_i32_31] : memref<50x32xf32, #tpu.memory_space<any>> -> memref<1x32xf32, #tpu.memory_space<any>>
    %c0_i32_32 = arith.constant 0 : i32
    %70 = tpu.memref_slice %arg8[%c3_i32_29, %c0_i32_32] : memref<8x32xf32, #tpu.memory_space<vmem>> -> memref<1x32xf32, #tpu.memory_space<vmem>>
    %71 = tpu.memref_slice %arg9[%c3_i32_29] : memref<8x!tpu.dma_semaphore, #tpu.memory_space<semaphore_mem>> -> memref<1x!tpu.dma_semaphore, #tpu.memory_space<semaphore_mem>>
    %72 = tpu.memref_squeeze %71 : memref<1x!tpu.dma_semaphore, #tpu.memory_space<semaphore_mem>> -> memref<!tpu.dma_semaphore, #tpu.memory_space<semaphore_mem>>
    tpu.wait_dma2 semaphore(%72 : memref<!tpu.dma_semaphore, #tpu.memory_space<semaphore_mem>>) src(%69 : memref<1x32xf32, #tpu.memory_space<any>>) dst(%70 : memref<1x32xf32, #tpu.memory_space<vmem>>)
    %c4_i32_33 = arith.constant 4 : i32
    %c0_i32_34 = arith.constant 0 : i32
    %c0_i32_35 = arith.constant 0 : i32
    %73 = tpu.memref_slice %arg2[%c0_i32_34, %c0_i32_35] : memref<50x32xf32, #tpu.memory_space<any>> -> memref<1x32xf32, #tpu.memory_space<any>>
    %c0_i32_36 = arith.constant 0 : i32
    %74 = tpu.memref_slice %arg8[%c4_i32_33, %c0_i32_36] : memref<8x32xf32, #tpu.memory_space<vmem>> -> memref<1x32xf32, #tpu.memory_space<vmem>>
    %75 = tpu.memref_slice %arg9[%c4_i32_33] : memref<8x!tpu.dma_semaphore, #tpu.memory_space<semaphore_mem>> -> memref<1x!tpu.dma_semaphore, #tpu.memory_space<semaphore_mem>>
    %76 = tpu.memref_squeeze %75 : memref<1x!tpu.dma_semaphore, #tpu.memory_space<semaphore_mem>> -> memref<!tpu.dma_semaphore, #tpu.memory_space<semaphore_mem>>
    tpu.wait_dma2 semaphore(%76 : memref<!tpu.dma_semaphore, #tpu.memory_space<semaphore_mem>>) src(%73 : memref<1x32xf32, #tpu.memory_space<any>>) dst(%74 : memref<1x32xf32, #tpu.memory_space<vmem>>)
    %c5_i32_37 = arith.constant 5 : i32
    %c0_i32_38 = arith.constant 0 : i32
    %c0_i32_39 = arith.constant 0 : i32
    %77 = tpu.memref_slice %arg2[%c0_i32_38, %c0_i32_39] : memref<50x32xf32, #tpu.memory_space<any>> -> memref<1x32xf32, #tpu.memory_space<any>>
    %c0_i32_40 = arith.constant 0 : i32
    %78 = tpu.memref_slice %arg8[%c5_i32_37, %c0_i32_40] : memref<8x32xf32, #tpu.memory_space<vmem>> -> memref<1x32xf32, #tpu.memory_space<vmem>>
    %79 = tpu.memref_slice %arg9[%c5_i32_37] : memref<8x!tpu.dma_semaphore, #tpu.memory_space<semaphore_mem>> -> memref<1x!tpu.dma_semaphore, #tpu.memory_space<semaphore_mem>>
    %80 = tpu.memref_squeeze %79 : memref<1x!tpu.dma_semaphore, #tpu.memory_space<semaphore_mem>> -> memref<!tpu.dma_semaphore, #tpu.memory_space<semaphore_mem>>
    tpu.wait_dma2 semaphore(%80 : memref<!tpu.dma_semaphore, #tpu.memory_space<semaphore_mem>>) src(%77 : memref<1x32xf32, #tpu.memory_space<any>>) dst(%78 : memref<1x32xf32, #tpu.memory_space<vmem>>)
    %c6_i32_41 = arith.constant 6 : i32
    %c0_i32_42 = arith.constant 0 : i32
    %c0_i32_43 = arith.constant 0 : i32
    %81 = tpu.memref_slice %arg2[%c0_i32_42, %c0_i32_43] : memref<50x32xf32, #tpu.memory_space<any>> -> memref<1x32xf32, #tpu.memory_space<any>>
    %c0_i32_44 = arith.constant 0 : i32
    %82 = tpu.memref_slice %arg8[%c6_i32_41, %c0_i32_44] : memref<8x32xf32, #tpu.memory_space<vmem>> -> memref<1x32xf32, #tpu.memory_space<vmem>>
    %83 = tpu.memref_slice %arg9[%c6_i32_41] : memref<8x!tpu.dma_semaphore, #tpu.memory_space<semaphore_mem>> -> memref<1x!tpu.dma_semaphore, #tpu.memory_space<semaphore_mem>>
    %84 = tpu.memref_squeeze %83 : memref<1x!tpu.dma_semaphore, #tpu.memory_space<semaphore_mem>> -> memref<!tpu.dma_semaphore, #tpu.memory_space<semaphore_mem>>
    tpu.wait_dma2 semaphore(%84 : memref<!tpu.dma_semaphore, #tpu.memory_space<semaphore_mem>>) src(%81 : memref<1x32xf32, #tpu.memory_space<any>>) dst(%82 : memref<1x32xf32, #tpu.memory_space<vmem>>)
    %c7_i32_45 = arith.constant 7 : i32
    %c0_i32_46 = arith.constant 0 : i32
    %c0_i32_47 = arith.constant 0 : i32
    %85 = tpu.memref_slice %arg2[%c0_i32_46, %c0_i32_47] : memref<50x32xf32, #tpu.memory_space<any>> -> memref<1x32xf32, #tpu.memory_space<any>>
    %c0_i32_48 = arith.constant 0 : i32
    %86 = tpu.memref_slice %arg8[%c7_i32_45, %c0_i32_48] : memref<8x32xf32, #tpu.memory_space<vmem>> -> memref<1x32xf32, #tpu.memory_space<vmem>>
    %87 = tpu.memref_slice %arg9[%c7_i32_45] : memref<8x!tpu.dma_semaphore, #tpu.memory_space<semaphore_mem>> -> memref<1x!tpu.dma_semaphore, #tpu.memory_space<semaphore_mem>>
    %88 = tpu.memref_squeeze %87 : memref<1x!tpu.dma_semaphore, #tpu.memory_space<semaphore_mem>> -> memref<!tpu.dma_semaphore, #tpu.memory_space<semaphore_mem>>
    tpu.wait_dma2 semaphore(%88 : memref<!tpu.dma_semaphore, #tpu.memory_space<semaphore_mem>>) src(%85 : memref<1x32xf32, #tpu.memory_space<any>>) dst(%86 : memref<1x32xf32, #tpu.memory_space<vmem>>)
    %c8_i32_49 = arith.constant 8 : i32
    %c0 = arith.constant 0 : index
    %c0_50 = arith.constant 0 : index
    %89 = vector.load %arg8[%c0, %c0_50] : memref<8x32xf32, #tpu.memory_space<vmem>>, vector<8x32xf32>
    %90 = arith.truncf %89 : vector<8x32xf32> to vector<8x32xbf16>
    %c0_51 = arith.constant 0 : index
    %c0_52 = arith.constant 0 : index
    %91 = vector.load %arg3[%c0_51, %c0_52] : memref<32x192xbf16, #tpu.memory_space<vmem>>, vector<32x192xbf16>
    %cst = arith.constant dense<0.000000e+00> : vector<8x192xf32>
    %92 = tpu.matmul %90, %91, %cst {dimension_numbers = #tpu.dot_dimension_numbers<[1], [0], [0], [1], [0, 0, 1, 1], [], []>} : vector<8x32xbf16>, vector<32x192xbf16>, vector<8x192xf32> -> vector<8x192xf32>
    %c0_53 = arith.constant 0 : index
    %c0_54 = arith.constant 0 : index
    %93 = vector.load %arg4[%c0_53, %c0_54] : memref<1x192xf32, #tpu.memory_space<vmem>>, vector<1x192xf32>
    %94 = vector.broadcast %93 : vector<1x192xf32> to vector<8x192xf32>
    %95 = arith.addf %92, %94 : vector<8x192xf32>
    %96 = vector.extract_strided_slice %95 {offsets = [0, 0], sizes = [8, 64], strides = [1, 1]} : vector<8x192xf32> to vector<8x64xf32>
    %97 = arith.negf %96 : vector<8x64xf32>
    %98 = math.exp %97 : vector<8x64xf32>
    %cst_55 = arith.constant 1.000000e+00 : f32
    %99 = vector.broadcast %cst_55 : f32 to vector<8x64xf32>
    %100 = arith.addf %99, %98 : vector<8x64xf32>
    %101 = arith.divf %99, %100 : vector<8x64xf32>
    %102 = vector.extract_strided_slice %95 {offsets = [0, 64], sizes = [8, 64], strides = [1, 1]} : vector<8x192xf32> to vector<8x64xf32>
    %103 = math.tanh %102 : vector<8x64xf32>
    %104 = vector.extract_strided_slice %95 {offsets = [0, 128], sizes = [8, 64], strides = [1, 1]} : vector<8x192xf32> to vector<8x64xf32>
    %105 = arith.negf %104 : vector<8x64xf32>
    %106 = math.exp %105 : vector<8x64xf32>
    %cst_56 = arith.constant 1.000000e+00 : f32
    %107 = vector.broadcast %cst_56 : f32 to vector<8x64xf32>
    %108 = arith.addf %107, %106 : vector<8x64xf32>
    %109 = arith.divf %107, %108 : vector<8x64xf32>
    %110 = arith.mulf %101, %103 : vector<8x64xf32>
    %111 = math.tanh %110 : vector<8x64xf32>
    %112 = arith.mulf %109, %111 : vector<8x64xf32>
    %113 = arith.truncf %112 : vector<8x64xf32> to vector<8x64xbf16>
    %c0_57 = arith.constant 0 : index
    %c0_58 = arith.constant 0 : index
    %114 = vector.load %arg5[%c0_57, %c0_58] : memref<64x128xbf16, #tpu.memory_space<vmem>>, vector<64x128xbf16>
    %cst_59 = arith.constant dense<0.000000e+00> : vector<8x128xf32>
    %115 = tpu.matmul %113, %114, %cst_59 {dimension_numbers = #tpu.dot_dimension_numbers<[1], [0], [0], [1], [0, 0, 1, 1], [], []>} : vector<8x64xbf16>, vector<64x128xbf16>, vector<8x128xf32> -> vector<8x128xf32>
    %c0_60 = arith.constant 0 : index
    %c0_61 = arith.constant 0 : index
    %116 = vector.load %arg6[%c0_60, %c0_61] : memref<1x128xf32, #tpu.memory_space<vmem>>, vector<1x128xf32>
    %117 = vector.broadcast %116 : vector<1x128xf32> to vector<8x128xf32>
    %118 = arith.addf %115, %117 : vector<8x128xf32>
    %cst_62 = arith.constant dense<0xFF800000> : vector<8xf32>
    %119 = vector.multi_reduction <maximumf>, %118, %cst_62 [1] : vector<8x128xf32> to vector<8xf32>
    %120 = vector.shape_cast %119 : vector<8xf32> to vector<8x1xf32>
    %121 = vector.broadcast %120 : vector<8x1xf32> to vector<8x128xf32>
    %122 = arith.subf %118, %121 : vector<8x128xf32>
    %123 = math.exp %122 : vector<8x128xf32>
    %cst_63 = arith.constant dense<0.000000e+00> : vector<8xf32>
    %124 = vector.multi_reduction <add>, %123, %cst_63 [1] : vector<8x128xf32> to vector<8xf32>
    %125 = vector.shape_cast %124 : vector<8xf32> to vector<8x1xf32>
    %126 = math.log %125 : vector<8x1xf32>
    %127 = vector.broadcast %126 : vector<8x1xf32> to vector<8x128xf32>
    %128 = arith.subf %122, %127 : vector<8x128xf32>
    %c0_64 = arith.constant 0 : index
    %c0_65 = arith.constant 0 : index
    %129 = vector.load %arg7[%c0_64, %c0_65] : memref<8x128xf32, #tpu.memory_space<vmem>>, vector<8x128xf32>
    tpu.vector_store %arg7[%c0_64, %c0_65], %128 {strides = array<i32>} : memref<8x128xf32, #tpu.memory_space<vmem>>, vector<8x128xf32>,
    return
  }
  func.func @transform_1(%arg0: i32, %arg1: memref<8xi32, #tpu.memory_space<smem>>) -> (i32, i32) {
    %c0_i32 = arith.constant 0 : i32
    %c0_i32_0 = arith.constant 0 : i32
    %c0_i32_1 = arith.constant 0 : i32
    return %c0_i32, %c0_i32_0 : i32, i32
  }
  func.func @transform_2(%arg0: i32, %arg1: memref<8xi32, #tpu.memory_space<smem>>) -> (i32, i32) {
    %c0_i32 = arith.constant 0 : i32
    %c0_i32_0 = arith.constant 0 : i32
    %c0_i32_1 = arith.constant 0 : i32
    return %c0_i32, %c0_i32_0 : i32, i32
  }
  func.func @transform_3(%arg0: i32, %arg1: memref<8xi32, #tpu.memory_space<smem>>) -> (i32, i32) {
    %c0_i32 = arith.constant 0 : i32
    %c0_i32_0 = arith.constant 0 : i32
    %c0_i32_1 = arith.constant 0 : i32
    return %c0_i32, %c0_i32_0 : i32, i32
  }
  func.func @transform_4(%arg0: i32, %arg1: memref<8xi32, #tpu.memory_space<smem>>) -> (i32, i32) {
    %c0_i32 = arith.constant 0 : i32
    %c0_i32_0 = arith.constant 0 : i32
    %c0_i32_1 = arith.constant 0 : i32
    return %c0_i32, %c0_i32_0 : i32, i32
  }
  func.func @transform_5(%arg0: i32, %arg1: memref<8xi32, #tpu.memory_space<smem>>) -> (i32, i32) {
    %c0_i32 = arith.constant 0 : i32
    %c0_i32_0 = arith.constant 0 : i32
    return %arg0, %c0_i32 : i32, i32
  }
}

</mosaic_0001>

<llo_original>
// kernel: tpu_custom_call.1
$region0: #{tpu_custom_call.1}
  #allocation0 [shape = 'u32[]', space=smem, size = 0x4, offset = 0x4, fixed_abs, tag = 'smem constant byte address 0x4 - core index']
  #allocation1 [shape = 'u32[144,128]{1,0:T(1,128)}', space=vmem, size = 0x12000, scoped, tag = 'internal scratch']
  #allocation2 [shape = 'f32[8,32]{1,0:T(8,128)}', space=vmem, size = 0x1000, scoped, tag = 'scratch operand']
  #allocation3 [shape = 's32[8]{0}', space=sflag, size = 0x20, scoped, tag = 'scratch operand']
  #allocation4 [shape = 's32[1]{0}', space=sflag, size = 0x4, scoped, tag = 'scoped memory for tpu_custom_call.1']
  #allocation5 [shape = 'u8[512]{0}', space=smem, size = 0x200, scoped, tag = 'prefetched SMEM operand 0']
  #allocation8 [shape = 's32[]', space=sflag, size = 0x4, offset = 0, fixed_abs, tag = 'sflag constant byte address 0x0 - dummy sync flag']
  #allocation9 [shape = 's32[]', space=sflag, size = 0x4, offset = 0, fixed_abs, tag = 'sflag constant byte address 0x0 - dummy sync flag']
  #allocation10 [shape = 's32[]', space=sflag, size = 0x4, offset = 0, fixed_abs, tag = 'sflag constant byte address 0x0 - dummy sync flag']
  #allocation11 [shape = 's32[]', space=sflag, size = 0x4, offset = 0, fixed_abs, tag = 'sflag constant byte address 0x0 - dummy sync flag']
  #allocation12 [shape = 's32[]', space=sflag, size = 0x4, offset = 0, fixed_abs, tag = 'sflag constant byte address 0x0 - dummy sync flag']
  #allocation13 [shape = 's32[]', space=sflag, size = 0x4, offset = 0, fixed_abs, tag = 'sflag constant byte address 0x0 - dummy sync flag']
  #allocation14 [shape = 's32[]', space=sflag, size = 0x4, offset = 0, fixed_abs, tag = 'sflag constant byte address 0x0 - dummy sync flag']
  #allocation15 [shape = 's32[]', space=sflag, size = 0x4, offset = 0, fixed_abs, tag = 'sflag constant byte address 0x0 - dummy sync flag']
  %s0 = inlined_call_operand.vmem [shape: s32[8], index: 0, kind: input, shape index: {}]
  %s1 = inlined_call_operand.vmem [shape: f32[50,32], index: 1, kind: input, shape index: {}]
  %s2 = inlined_call_operand.vmem [shape: bf16[32,192], index: 2, kind: input, shape index: {}]
  %s3 = inlined_call_operand.vmem [shape: f32[1,192], index: 3, kind: input, shape index: {}]
  %s4 = inlined_call_operand.vmem [shape: bf16[64,128], index: 4, kind: input, shape index: {}]
  %s5 = inlined_call_operand.vmem [shape: f32[1,128], index: 5, kind: input, shape index: {}]
  %s6 = inlined_call_operand.hbm [shape: f32[8,128], index: 6, kind: output, shape index: {}]
  %s7 = sld [smem:[#allocation0]]
  $region266: #{tpu_custom_call.1} parent=0
    _
  %s9 = ssub.s32 1, %s7
  %s10 = scalar_select 0, %s9, %s7
  %s11 = sshll.u32 %s0, 4
  %s12 = int_to_ptr.vmem [resolvable:$true] %s11
  %14 = dma.vmem_to_smem %s12, 16, [#allocation5], [#allocation4]
  %15 = dma.done [#allocation4], 16
  %16 = sfence
  $region1: #{tpu_custom_call.1} parent=0
    #allocation6 [shape = 'u8[4096]{0}', space=vmem, size = 0x1000, scoped, tag = 'output window, operand 0, single buffered']
    #allocation7 [shape = 's32[1]{0}', space=sflag, size = 0x4, scoped, tag = 'scoped memory for tpu_custom_call.1']
    %17 = vsyncpa [#allocation7], 0
    // Predicated region
    $region2: #{tpu_custom_call.1} parent=1 // pred_check
      _
    $region3: #{tpu_custom_call.1} parent=1 // pred_check_branch
      %19 = sbr.rel (0) target = $region5
    $region4: #{tpu_custom_call.1} parent=1 // pred_region
      _
    $region5: #{tpu_custom_call.1} parent=1 // pred_fallthru
      _
    // Predicated region
    $region6: #{tpu_custom_call.1} parent=1 // pred_check
      _
    $region7: #{tpu_custom_call.1} parent=1 // pred_check_branch
      %21 = sbr.rel (0) target = $region9
    $region8: #{tpu_custom_call.1} parent=1 // pred_region
      _
    $region9: #{tpu_custom_call.1} parent=1 // pred_fallthru
      _
    // Predicated region
    $region10: #{tpu_custom_call.1} parent=1 // pred_check
      _
    $region11: #{tpu_custom_call.1} parent=1 // pred_check_branch
      %23 = sbr.rel (0) target = $region13
    $region12: #{tpu_custom_call.1} parent=1 // pred_region
      _
    $region13: #{tpu_custom_call.1} parent=1 // pred_fallthru
      _
    // Predicated region
    $region14: #{tpu_custom_call.1} parent=1 // pred_check
      _
    $region15: #{tpu_custom_call.1} parent=1 // pred_check_branch
      %25 = sbr.rel (0) target = $region17
    $region16: #{tpu_custom_call.1} parent=1 // pred_region
      _
    $region17: #{tpu_custom_call.1} parent=1 // pred_fallthru
      _
    %s27 = smul.u32 0, 8
    %s28 = sld [smem:[#allocation5 + %s27]]
    %s29 = scalar_lea.vmem %s1, %s28
    %p31 = scmp.lt.u32.totalorder 1, 8
    %p32 = pneg %p31
    // Predicated region
    $region18: #{tpu_custom_call.1} parent=1 // pred_check
      _
    $region19: #{tpu_custom_call.1} parent=1 // pred_check_branch
      %34 = sbr.rel (%p31) target = $region21
    $region20: #{tpu_custom_call.1} parent=1 // pred_region
      %s49 = sand.u32 1, 7
      %p50 = scmp.eq.s32.totalorder %s49, 0
      %p51 = pneg %p50
      // Predicated region
      $region33: #{tpu_custom_call.1} parent=20 // pred_check
        _
      $region34: #{tpu_custom_call.1} parent=20 // pred_check_branch
        %53 = sbr.rel (%p50) target = $region36
      $region35: #{tpu_custom_call.1} parent=20 // pred_region
        %s54 = sand.u32 1, 7
        %s55 = ssub.s32 1, %s54
        %s56 = scalar_lea.vmem %s29, %s55
        %s57 = ssub.s32 1, %s54
        %s58 = scalar_lea.vmem [#allocation2], %s57
        %s59 = sshllo.u32 0, %s54
        loop: start=0, step=1, limit=1
        $region37: #{tpu_custom_call.1} parent=35 // loop_pre_header
          _
        $region38: #{tpu_custom_call.1} parent=35 // loop_header
          %s61 = sphi 0, %s65
          %p62 = scmp.ge.s32.totalorder %s61, 1
          %s66 = sphi %s56, %s56
          %s67 = sphi %s58, %s58
        $region39: #{tpu_custom_call.1} parent=35 // loop_header_branch
          %64 = sbr.rel (%p62) target = $region43
        $region40: #{tpu_custom_call.1} parent=35 // loop_body
          %v68 = vld [vmem:[%s66] sm:%s59]
          %69 = vst [vmem:[%s67] sm:%s59] %v68
        $region41: #{tpu_custom_call.1} parent=35 // loop_footer
          %s65 = sadd.s32 1, %s61
        $region42: #{tpu_custom_call.1} parent=35 // loop_footer_branch
          %60 = sbr.rel target = $region38
        $region43: #{tpu_custom_call.1} parent=35 // loop_exit
          _
      $region36: #{tpu_custom_call.1} parent=20 // pred_fallthru
        _
    $region21: #{tpu_custom_call.1} parent=1 // pred_fallthru
      _
    // Predicated region
    $region22: #{tpu_custom_call.1} parent=1 // pred_check
      %p35 = pneg %p31
    $region23: #{tpu_custom_call.1} parent=1 // pred_check_branch
      %37 = sbr.rel (%p35) target = $region25
    $region24: #{tpu_custom_call.1} parent=1 // pred_region
      %s38 = sshllo.u32 0, 1
      loop: start=0, step=1, limit=1
      $region26: #{tpu_custom_call.1} parent=24 // loop_pre_header
        _
      $region27: #{tpu_custom_call.1} parent=24 // loop_header
        %s40 = sphi 0, %s44
        %p41 = scmp.ge.s32.totalorder %s40, 1
        %s45 = sphi %s29, %s29
        %s46 = sphi [#allocation2], [#allocation2]
      $region28: #{tpu_custom_call.1} parent=24 // loop_header_branch
        %43 = sbr.rel (%p41) target = $region32
      $region29: #{tpu_custom_call.1} parent=24 // loop_body
        %v47 = vld [vmem:[%s45] sm:%s38]
        %48 = vst [vmem:[%s46] sm:%s38] %v47
      $region30: #{tpu_custom_call.1} parent=24 // loop_footer
        %s44 = sadd.s32 1, %s40
      $region31: #{tpu_custom_call.1} parent=24 // loop_footer_branch
        %39 = sbr.rel target = $region27
      $region32: #{tpu_custom_call.1} parent=24 // loop_exit
        _
    $region25: #{tpu_custom_call.1} parent=1 // pred_fallthru
      _
    // Predicated region
    $region44: #{tpu_custom_call.1} parent=1 // pred_check
      _
    $region45: #{tpu_custom_call.1} parent=1 // pred_check_branch
      %72 = sbr.rel (0) target = $region47
    $region46: #{tpu_custom_call.1} parent=1 // pred_region
      %73 = vsyncadd [#allocation3], 16
    $region47: #{tpu_custom_call.1} parent=1 // pred_fallthru
      _
    %s74 = sadd.s32 %s27, 1
    %s75 = sld [smem:[#allocation5 + %s74]]
    %s76 = scalar_lea.vmem %s1, %s75
    %s77 = scalar_lea.vmem [#allocation2], 1
    %s78 = scalar_lea.sflag [#allocation3], 1
    %p80 = scmp.lt.u32.totalorder 1, 8
    %p81 = pneg %p80
    // Predicated region
    $region48: #{tpu_custom_call.1} parent=1 // pred_check
      _
    $region49: #{tpu_custom_call.1} parent=1 // pred_check_branch
      %83 = sbr.rel (%p80) target = $region51
    $region50: #{tpu_custom_call.1} parent=1 // pred_region
      %s98 = sand.u32 1, 7
      %p99 = scmp.eq.s32.totalorder %s98, 0
      %p100 = pneg %p99
      // Predicated region
      $region63: #{tpu_custom_call.1} parent=50 // pred_check
        _
      $region64: #{tpu_custom_call.1} parent=50 // pred_check_branch
        %102 = sbr.rel (%p99) target = $region66
      $region65: #{tpu_custom_call.1} parent=50 // pred_region
        %s103 = sand.u32 1, 7
        %s104 = ssub.s32 1, %s103
        %s105 = scalar_lea.vmem %s76, %s104
        %s106 = ssub.s32 1, %s103
        %s107 = scalar_lea.vmem %s77, %s106 [#allocation2]
        %s108 = sshllo.u32 0, %s103
        loop: start=0, step=1, limit=1
        $region67: #{tpu_custom_call.1} parent=65 // loop_pre_header
          _
        $region68: #{tpu_custom_call.1} parent=65 // loop_header
          %s110 = sphi 0, %s114
          %p111 = scmp.ge.s32.totalorder %s110, 1
          %s115 = sphi %s105, %s105
          %s116 = sphi %s107, %s107
        $region69: #{tpu_custom_call.1} parent=65 // loop_header_branch
          %113 = sbr.rel (%p111) target = $region73
        $region70: #{tpu_custom_call.1} parent=65 // loop_body
          %v117 = vld [vmem:[%s115] sm:%s108]
          %118 = vst [vmem:[%s116] sm:%s108] %v117
        $region71: #{tpu_custom_call.1} parent=65 // loop_footer
          %s114 = sadd.s32 1, %s110
        $region72: #{tpu_custom_call.1} parent=65 // loop_footer_branch
          %109 = sbr.rel target = $region68
        $region73: #{tpu_custom_call.1} parent=65 // loop_exit
          _
      $region66: #{tpu_custom_call.1} parent=50 // pred_fallthru
        _
    $region51: #{tpu_custom_call.1} parent=1 // pred_fallthru
      _
    // Predicated region
    $region52: #{tpu_custom_call.1} parent=1 // pred_check
      %p84 = pneg %p80
    $region53: #{tpu_custom_call.1} parent=1 // pred_check_branch
      %86 = sbr.rel (%p84) target = $region55
    $region54: #{tpu_custom_call.1} parent=1 // pred_region
      %s87 = sshllo.u32 0, 1
      loop: start=0, step=1, limit=1
      $region56: #{tpu_custom_call.1} parent=54 // loop_pre_header
        _
      $region57: #{tpu_custom_call.1} parent=54 // loop_header
        %s89 = sphi 0, %s93
        %p90 = scmp.ge.s32.totalorder %s89, 1
        %s94 = sphi %s76, %s76
        %s95 = sphi %s77, %s77
      $region58: #{tpu_custom_call.1} parent=54 // loop_header_branch
        %92 = sbr.rel (%p90) target = $region62
      $region59: #{tpu_custom_call.1} parent=54 // loop_body
        %v96 = vld [vmem:[%s94] sm:%s87]
        %97 = vst [vmem:[%s95] sm:%s87] %v96
      $region60: #{tpu_custom_call.1} parent=54 // loop_footer
        %s93 = sadd.s32 1, %s89
      $region61: #{tpu_custom_call.1} parent=54 // loop_footer_branch
        %88 = sbr.rel target = $region57
      $region62: #{tpu_custom_call.1} parent=54 // loop_exit
        _
    $region55: #{tpu_custom_call.1} parent=1 // pred_fallthru
      _
    // Predicated region
    $region74: #{tpu_custom_call.1} parent=1 // pred_check
      _
    $region75: #{tpu_custom_call.1} parent=1 // pred_check_branch
      %121 = sbr.rel (0) target = $region77
    $region76: #{tpu_custom_call.1} parent=1 // pred_region
      %122 = vsyncadd %s78, 16
    $region77: #{tpu_custom_call.1} parent=1 // pred_fallthru
      _
    %s123 = sadd.s32 %s27, 2
    %s124 = sld [smem:[#allocation5 + %s123]]
    %s125 = scalar_lea.vmem %s1, %s124
    %s126 = scalar_lea.vmem [#allocation2], 2
    %s127 = scalar_lea.sflag [#allocation3], 2
    %p129 = scmp.lt.u32.totalorder 1, 8
    %p130 = pneg %p129
    // Predicated region
    $region78: #{tpu_custom_call.1} parent=1 // pred_check
      _
    $region79: #{tpu_custom_call.1} parent=1 // pred_check_branch
      %132 = sbr.rel (%p129) target = $region81
    $region80: #{tpu_custom_call.1} parent=1 // pred_region
      %s147 = sand.u32 1, 7
      %p148 = scmp.eq.s32.totalorder %s147, 0
      %p149 = pneg %p148
      // Predicated region
      $region93: #{tpu_custom_call.1} parent=80 // pred_check
        _
      $region94: #{tpu_custom_call.1} parent=80 // pred_check_branch
        %151 = sbr.rel (%p148) target = $region96
      $region95: #{tpu_custom_call.1} parent=80 // pred_region
        %s152 = sand.u32 1, 7
        %s153 = ssub.s32 1, %s152
        %s154 = scalar_lea.vmem %s125, %s153
        %s155 = ssub.s32 1, %s152
        %s156 = scalar_lea.vmem %s126, %s155 [#allocation2]
        %s157 = sshllo.u32 0, %s152
        loop: start=0, step=1, limit=1
        $region97: #{tpu_custom_call.1} parent=95 // loop_pre_header
          _
        $region98: #{tpu_custom_call.1} parent=95 // loop_header
          %s159 = sphi 0, %s163
          %p160 = scmp.ge.s32.totalorder %s159, 1
          %s164 = sphi %s154, %s154
          %s165 = sphi %s156, %s156
        $region99: #{tpu_custom_call.1} parent=95 // loop_header_branch
          %162 = sbr.rel (%p160) target = $region103
        $region100: #{tpu_custom_call.1} parent=95 // loop_body
          %v166 = vld [vmem:[%s164] sm:%s157]
          %167 = vst [vmem:[%s165] sm:%s157] %v166
        $region101: #{tpu_custom_call.1} parent=95 // loop_footer
          %s163 = sadd.s32 1, %s159
        $region102: #{tpu_custom_call.1} parent=95 // loop_footer_branch
          %158 = sbr.rel target = $region98
        $region103: #{tpu_custom_call.1} parent=95 // loop_exit
          _
      $region96: #{tpu_custom_call.1} parent=80 // pred_fallthru
        _
    $region81: #{tpu_custom_call.1} parent=1 // pred_fallthru
      _
    // Predicated region
    $region82: #{tpu_custom_call.1} parent=1 // pred_check
      %p133 = pneg %p129
    $region83: #{tpu_custom_call.1} parent=1 // pred_check_branch
      %135 = sbr.rel (%p133) target = $region85
    $region84: #{tpu_custom_call.1} parent=1 // pred_region
      %s136 = sshllo.u32 0, 1
      loop: start=0, step=1, limit=1
      $region86: #{tpu_custom_call.1} parent=84 // loop_pre_header
        _
      $region87: #{tpu_custom_call.1} parent=84 // loop_header
        %s138 = sphi 0, %s142
        %p139 = scmp.ge.s32.totalorder %s138, 1
        %s143 = sphi %s125, %s125
        %s144 = sphi %s126, %s126
      $region88: #{tpu_custom_call.1} parent=84 // loop_header_branch
        %141 = sbr.rel (%p139) target = $region92
      $region89: #{tpu_custom_call.1} parent=84 // loop_body
        %v145 = vld [vmem:[%s143] sm:%s136]
        %146 = vst [vmem:[%s144] sm:%s136] %v145
      $region90: #{tpu_custom_call.1} parent=84 // loop_footer
        %s142 = sadd.s32 1, %s138
      $region91: #{tpu_custom_call.1} parent=84 // loop_footer_branch
        %137 = sbr.rel target = $region87
      $region92: #{tpu_custom_call.1} parent=84 // loop_exit
        _
    $region85: #{tpu_custom_call.1} parent=1 // pred_fallthru
      _
    // Predicated region
    $region104: #{tpu_custom_call.1} parent=1 // pred_check
      _
    $region105: #{tpu_custom_call.1} parent=1 // pred_check_branch
      %170 = sbr.rel (0) target = $region107
    $region106: #{tpu_custom_call.1} parent=1 // pred_region
      %171 = vsyncadd %s127, 16
    $region107: #{tpu_custom_call.1} parent=1 // pred_fallthru
      _
    %s172 = sadd.s32 %s27, 3
    %s173 = sld [smem:[#allocation5 + %s172]]
    %s174 = scalar_lea.vmem %s1, %s173
    %s175 = scalar_lea.vmem [#allocation2], 3
    %s176 = scalar_lea.sflag [#allocation3], 3
    %p178 = scmp.lt.u32.totalorder 1, 8
    %p179 = pneg %p178
    // Predicated region
    $region108: #{tpu_custom_call.1} parent=1 // pred_check
      _
    $region109: #{tpu_custom_call.1} parent=1 // pred_check_branch
      %181 = sbr.rel (%p178) target = $region111
    $region110: #{tpu_custom_call.1} parent=1 // pred_region
      %s196 = sand.u32 1, 7
      %p197 = scmp.eq.s32.totalorder %s196, 0
      %p198 = pneg %p197
      // Predicated region
      $region123: #{tpu_custom_call.1} parent=110 // pred_check
        _
      $region124: #{tpu_custom_call.1} parent=110 // pred_check_branch
        %200 = sbr.rel (%p197) target = $region126
      $region125: #{tpu_custom_call.1} parent=110 // pred_region
        %s201 = sand.u32 1, 7
        %s202 = ssub.s32 1, %s201
        %s203 = scalar_lea.vmem %s174, %s202
        %s204 = ssub.s32 1, %s201
        %s205 = scalar_lea.vmem %s175, %s204 [#allocation2]
        %s206 = sshllo.u32 0, %s201
        loop: start=0, step=1, limit=1
        $region127: #{tpu_custom_call.1} parent=125 // loop_pre_header
          _
        $region128: #{tpu_custom_call.1} parent=125 // loop_header
          %s208 = sphi 0, %s212
          %p209 = scmp.ge.s32.totalorder %s208, 1
          %s213 = sphi %s203, %s203
          %s214 = sphi %s205, %s205
        $region129: #{tpu_custom_call.1} parent=125 // loop_header_branch
          %211 = sbr.rel (%p209) target = $region133
        $region130: #{tpu_custom_call.1} parent=125 // loop_body
          %v215 = vld [vmem:[%s213] sm:%s206]
          %216 = vst [vmem:[%s214] sm:%s206] %v215
        $region131: #{tpu_custom_call.1} parent=125 // loop_footer
          %s212 = sadd.s32 1, %s208
        $region132: #{tpu_custom_call.1} parent=125 // loop_footer_branch
          %207 = sbr.rel target = $region128
        $region133: #{tpu_custom_call.1} parent=125 // loop_exit
          _
      $region126: #{tpu_custom_call.1} parent=110 // pred_fallthru
        _
    $region111: #{tpu_custom_call.1} parent=1 // pred_fallthru
      _
    // Predicated region
    $region112: #{tpu_custom_call.1} parent=1 // pred_check
      %p182 = pneg %p178
    $region113: #{tpu_custom_call.1} parent=1 // pred_check_branch
      %184 = sbr.rel (%p182) target = $region115
    $region114: #{tpu_custom_call.1} parent=1 // pred_region
      %s185 = sshllo.u32 0, 1
      loop: start=0, step=1, limit=1
      $region116: #{tpu_custom_call.1} parent=114 // loop_pre_header
        _
      $region117: #{tpu_custom_call.1} parent=114 // loop_header
        %s187 = sphi 0, %s191
        %p188 = scmp.ge.s32.totalorder %s187, 1
        %s192 = sphi %s174, %s174
        %s193 = sphi %s175, %s175
      $region118: #{tpu_custom_call.1} parent=114 // loop_header_branch
        %190 = sbr.rel (%p188) target = $region122
      $region119: #{tpu_custom_call.1} parent=114 // loop_body
        %v194 = vld [vmem:[%s192] sm:%s185]
        %195 = vst [vmem:[%s193] sm:%s185] %v194
      $region120: #{tpu_custom_call.1} parent=114 // loop_footer
        %s191 = sadd.s32 1, %s187
      $region121: #{tpu_custom_call.1} parent=114 // loop_footer_branch
        %186 = sbr.rel target = $region117
      $region122: #{tpu_custom_call.1} parent=114 // loop_exit
        _
    $region115: #{tpu_custom_call.1} parent=1 // pred_fallthru
      _
    // Predicated region
    $region134: #{tpu_custom_call.1} parent=1 // pred_check
      _
    $region135: #{tpu_custom_call.1} parent=1 // pred_check_branch
      %219 = sbr.rel (0) target = $region137
    $region136: #{tpu_custom_call.1} parent=1 // pred_region
      %220 = vsyncadd %s176, 16
    $region137: #{tpu_custom_call.1} parent=1 // pred_fallthru
      _
    %s221 = sadd.s32 %s27, 4
    %s222 = sld [smem:[#allocation5 + %s221]]
    %s223 = scalar_lea.vmem %s1, %s222
    %s224 = scalar_lea.vmem [#allocation2], 4
    %s225 = scalar_lea.sflag [#allocation3], 4
    %p227 = scmp.lt.u32.totalorder 1, 8
    %p228 = pneg %p227
    // Predicated region
    $region138: #{tpu_custom_call.1} parent=1 // pred_check
      _
    $region139: #{tpu_custom_call.1} parent=1 // pred_check_branch
      %230 = sbr.rel (%p227) target = $region141
    $region140: #{tpu_custom_call.1} parent=1 // pred_region
      %s245 = sand.u32 1, 7
      %p246 = scmp.eq.s32.totalorder %s245, 0
      %p247 = pneg %p246
      // Predicated region
      $region153: #{tpu_custom_call.1} parent=140 // pred_check
        _
      $region154: #{tpu_custom_call.1} parent=140 // pred_check_branch
        %249 = sbr.rel (%p246) target = $region156
      $region155: #{tpu_custom_call.1} parent=140 // pred_region
        %s250 = sand.u32 1, 7
        %s251 = ssub.s32 1, %s250
        %s252 = scalar_lea.vmem %s223, %s251
        %s253 = ssub.s32 1, %s250
        %s254 = scalar_lea.vmem %s224, %s253 [#allocation2]
        %s255 = sshllo.u32 0, %s250
        loop: start=0, step=1, limit=1
        $region157: #{tpu_custom_call.1} parent=155 // loop_pre_header
          _
        $region158: #{tpu_custom_call.1} parent=155 // loop_header
          %s257 = sphi 0, %s261
          %p258 = scmp.ge.s32.totalorder %s257, 1
          %s262 = sphi %s252, %s252
          %s263 = sphi %s254, %s254
        $region159: #{tpu_custom_call.1} parent=155 // loop_header_branch
          %260 = sbr.rel (%p258) target = $region163
        $region160: #{tpu_custom_call.1} parent=155 // loop_body
          %v264 = vld [vmem:[%s262] sm:%s255]
          %265 = vst [vmem:[%s263] sm:%s255] %v264
        $region161: #{tpu_custom_call.1} parent=155 // loop_footer
          %s261 = sadd.s32 1, %s257
        $region162: #{tpu_custom_call.1} parent=155 // loop_footer_branch
          %256 = sbr.rel target = $region158
        $region163: #{tpu_custom_call.1} parent=155 // loop_exit
          _
      $region156: #{tpu_custom_call.1} parent=140 // pred_fallthru
        _
    $region141: #{tpu_custom_call.1} parent=1 // pred_fallthru
      _
    // Predicated region
    $region142: #{tpu_custom_call.1} parent=1 // pred_check
      %p231 = pneg %p227
    $region143: #{tpu_custom_call.1} parent=1 // pred_check_branch
      %233 = sbr.rel (%p231) target = $region145
    $region144: #{tpu_custom_call.1} parent=1 // pred_region
      %s234 = sshllo.u32 0, 1
      loop: start=0, step=1, limit=1
      $region146: #{tpu_custom_call.1} parent=144 // loop_pre_header
        _
      $region147: #{tpu_custom_call.1} parent=144 // loop_header
        %s236 = sphi 0, %s240
        %p237 = scmp.ge.s32.totalorder %s236, 1
        %s241 = sphi %s223, %s223
        %s242 = sphi %s224, %s224
      $region148: #{tpu_custom_call.1} parent=144 // loop_header_branch
        %239 = sbr.rel (%p237) target = $region152
      $region149: #{tpu_custom_call.1} parent=144 // loop_body
        %v243 = vld [vmem:[%s241] sm:%s234]
        %244 = vst [vmem:[%s242] sm:%s234] %v243
      $region150: #{tpu_custom_call.1} parent=144 // loop_footer
        %s240 = sadd.s32 1, %s236
      $region151: #{tpu_custom_call.1} parent=144 // loop_footer_branch
        %235 = sbr.rel target = $region147
      $region152: #{tpu_custom_call.1} parent=144 // loop_exit
        _
    $region145: #{tpu_custom_call.1} parent=1 // pred_fallthru
      _
    // Predicated region
    $region164: #{tpu_custom_call.1} parent=1 // pred_check
      _
    $region165: #{tpu_custom_call.1} parent=1 // pred_check_branch
      %268 = sbr.rel (0) target = $region167
    $region166: #{tpu_custom_call.1} parent=1 // pred_region
      %269 = vsyncadd %s225, 16
    $region167: #{tpu_custom_call.1} parent=1 // pred_fallthru
      _
    %s270 = sadd.s32 %s27, 5
    %s271 = sld [smem:[#allocation5 + %s270]]
    %s272 = scalar_lea.vmem %s1, %s271
    %s273 = scalar_lea.vmem [#allocation2], 5
    %s274 = scalar_lea.sflag [#allocation3], 5
    %p276 = scmp.lt.u32.totalorder 1, 8
    %p277 = pneg %p276
    // Predicated region
    $region168: #{tpu_custom_call.1} parent=1 // pred_check
      _
    $region169: #{tpu_custom_call.1} parent=1 // pred_check_branch
      %279 = sbr.rel (%p276) target = $region171
    $region170: #{tpu_custom_call.1} parent=1 // pred_region
      %s294 = sand.u32 1, 7
      %p295 = scmp.eq.s32.totalorder %s294, 0
      %p296 = pneg %p295
      // Predicated region
      $region183: #{tpu_custom_call.1} parent=170 // pred_check
        _
      $region184: #{tpu_custom_call.1} parent=170 // pred_check_branch
        %298 = sbr.rel (%p295) target = $region186
      $region185: #{tpu_custom_call.1} parent=170 // pred_region
        %s299 = sand.u32 1, 7
        %s300 = ssub.s32 1, %s299
        %s301 = scalar_lea.vmem %s272, %s300
        %s302 = ssub.s32 1, %s299
        %s303 = scalar_lea.vmem %s273, %s302 [#allocation2]
        %s304 = sshllo.u32 0, %s299
        loop: start=0, step=1, limit=1
        $region187: #{tpu_custom_call.1} parent=185 // loop_pre_header
          _
        $region188: #{tpu_custom_call.1} parent=185 // loop_header
          %s306 = sphi 0, %s310
          %p307 = scmp.ge.s32.totalorder %s306, 1
          %s311 = sphi %s301, %s301
          %s312 = sphi %s303, %s303
        $region189: #{tpu_custom_call.1} parent=185 // loop_header_branch
          %309 = sbr.rel (%p307) target = $region193
        $region190: #{tpu_custom_call.1} parent=185 // loop_body
          %v313 = vld [vmem:[%s311] sm:%s304]
          %314 = vst [vmem:[%s312] sm:%s304] %v313
        $region191: #{tpu_custom_call.1} parent=185 // loop_footer
          %s310 = sadd.s32 1, %s306
        $region192: #{tpu_custom_call.1} parent=185 // loop_footer_branch
          %305 = sbr.rel target = $region188
        $region193: #{tpu_custom_call.1} parent=185 // loop_exit
          _
      $region186: #{tpu_custom_call.1} parent=170 // pred_fallthru
        _
    $region171: #{tpu_custom_call.1} parent=1 // pred_fallthru
      _
    // Predicated region
    $region172: #{tpu_custom_call.1} parent=1 // pred_check
      %p280 = pneg %p276
    $region173: #{tpu_custom_call.1} parent=1 // pred_check_branch
      %282 = sbr.rel (%p280) target = $region175
    $region174: #{tpu_custom_call.1} parent=1 // pred_region
      %s283 = sshllo.u32 0, 1
      loop: start=0, step=1, limit=1
      $region176: #{tpu_custom_call.1} parent=174 // loop_pre_header
        _
      $region177: #{tpu_custom_call.1} parent=174 // loop_header
        %s285 = sphi 0, %s289
        %p286 = scmp.ge.s32.totalorder %s285, 1
        %s290 = sphi %s272, %s272
        %s291 = sphi %s273, %s273
      $region178: #{tpu_custom_call.1} parent=174 // loop_header_branch
        %288 = sbr.rel (%p286) target = $region182
      $region179: #{tpu_custom_call.1} parent=174 // loop_body
        %v292 = vld [vmem:[%s290] sm:%s283]
        %293 = vst [vmem:[%s291] sm:%s283] %v292
      $region180: #{tpu_custom_call.1} parent=174 // loop_footer
        %s289 = sadd.s32 1, %s285
      $region181: #{tpu_custom_call.1} parent=174 // loop_footer_branch
        %284 = sbr.rel target = $region177
      $region182: #{tpu_custom_call.1} parent=174 // loop_exit
        _
    $region175: #{tpu_custom_call.1} parent=1 // pred_fallthru
      _
    // Predicated region
    $region194: #{tpu_custom_call.1} parent=1 // pred_check
      _
    $region195: #{tpu_custom_call.1} parent=1 // pred_check_branch
      %317 = sbr.rel (0) target = $region197
    $region196: #{tpu_custom_call.1} parent=1 // pred_region
      %318 = vsyncadd %s274, 16
    $region197: #{tpu_custom_call.1} parent=1 // pred_fallthru
      _
    %s319 = sadd.s32 %s27, 6
    %s320 = sld [smem:[#allocation5 + %s319]]
    %s321 = scalar_lea.vmem %s1, %s320
    %s322 = scalar_lea.vmem [#allocation2], 6
    %s323 = scalar_lea.sflag [#allocation3], 6
    %p325 = scmp.lt.u32.totalorder 1, 8
    %p326 = pneg %p325
    // Predicated region
    $region198: #{tpu_custom_call.1} parent=1 // pred_check
      _
    $region199: #{tpu_custom_call.1} parent=1 // pred_check_branch
      %328 = sbr.rel (%p325) target = $region201
    $region200: #{tpu_custom_call.1} parent=1 // pred_region
      %s343 = sand.u32 1, 7
      %p344 = scmp.eq.s32.totalorder %s343, 0
      %p345 = pneg %p344
      // Predicated region
      $region213: #{tpu_custom_call.1} parent=200 // pred_check
        _
      $region214: #{tpu_custom_call.1} parent=200 // pred_check_branch
        %347 = sbr.rel (%p344) target = $region216
      $region215: #{tpu_custom_call.1} parent=200 // pred_region
        %s348 = sand.u32 1, 7
        %s349 = ssub.s32 1, %s348
        %s350 = scalar_lea.vmem %s321, %s349
        %s351 = ssub.s32 1, %s348
        %s352 = scalar_lea.vmem %s322, %s351 [#allocation2]
        %s353 = sshllo.u32 0, %s348
        loop: start=0, step=1, limit=1
        $region217: #{tpu_custom_call.1} parent=215 // loop_pre_header
          _
        $region218: #{tpu_custom_call.1} parent=215 // loop_header
          %s355 = sphi 0, %s359
          %p356 = scmp.ge.s32.totalorder %s355, 1
          %s360 = sphi %s350, %s350
          %s361 = sphi %s352, %s352
        $region219: #{tpu_custom_call.1} parent=215 // loop_header_branch
          %358 = sbr.rel (%p356) target = $region223
        $region220: #{tpu_custom_call.1} parent=215 // loop_body
          %v362 = vld [vmem:[%s360] sm:%s353]
          %363 = vst [vmem:[%s361] sm:%s353] %v362
        $region221: #{tpu_custom_call.1} parent=215 // loop_footer
          %s359 = sadd.s32 1, %s355
        $region222: #{tpu_custom_call.1} parent=215 // loop_footer_branch
          %354 = sbr.rel target = $region218
        $region223: #{tpu_custom_call.1} parent=215 // loop_exit
          _
      $region216: #{tpu_custom_call.1} parent=200 // pred_fallthru
        _
    $region201: #{tpu_custom_call.1} parent=1 // pred_fallthru
      _
    // Predicated region
    $region202: #{tpu_custom_call.1} parent=1 // pred_check
      %p329 = pneg %p325
    $region203: #{tpu_custom_call.1} parent=1 // pred_check_branch
      %331 = sbr.rel (%p329) target = $region205
    $region204: #{tpu_custom_call.1} parent=1 // pred_region
      %s332 = sshllo.u32 0, 1
      loop: start=0, step=1, limit=1
      $region206: #{tpu_custom_call.1} parent=204 // loop_pre_header
        _
      $region207: #{tpu_custom_call.1} parent=204 // loop_header
        %s334 = sphi 0, %s338
        %p335 = scmp.ge.s32.totalorder %s334, 1
        %s339 = sphi %s321, %s321
        %s340 = sphi %s322, %s322
      $region208: #{tpu_custom_call.1} parent=204 // loop_header_branch
        %337 = sbr.rel (%p335) target = $region212
      $region209: #{tpu_custom_call.1} parent=204 // loop_body
        %v341 = vld [vmem:[%s339] sm:%s332]
        %342 = vst [vmem:[%s340] sm:%s332] %v341
      $region210: #{tpu_custom_call.1} parent=204 // loop_footer
        %s338 = sadd.s32 1, %s334
      $region211: #{tpu_custom_call.1} parent=204 // loop_footer_branch
        %333 = sbr.rel target = $region207
      $region212: #{tpu_custom_call.1} parent=204 // loop_exit
        _
    $region205: #{tpu_custom_call.1} parent=1 // pred_fallthru
      _
    // Predicated region
    $region224: #{tpu_custom_call.1} parent=1 // pred_check
      _
    $region225: #{tpu_custom_call.1} parent=1 // pred_check_branch
      %366 = sbr.rel (0) target = $region227
    $region226: #{tpu_custom_call.1} parent=1 // pred_region
      %367 = vsyncadd %s323, 16
    $region227: #{tpu_custom_call.1} parent=1 // pred_fallthru
      _
    %s368 = sadd.s32 %s27, 7
    %s369 = sld [smem:[#allocation5 + %s368]]
    %s370 = scalar_lea.vmem %s1, %s369
    %s371 = scalar_lea.vmem [#allocation2], 7
    %s372 = scalar_lea.sflag [#allocation3], 7
    %p374 = scmp.lt.u32.totalorder 1, 8
    %p375 = pneg %p374
    // Predicated region
    $region228: #{tpu_custom_call.1} parent=1 // pred_check
      _
    $region229: #{tpu_custom_call.1} parent=1 // pred_check_branch
      %377 = sbr.rel (%p374) target = $region231
    $region230: #{tpu_custom_call.1} parent=1 // pred_region
      %s392 = sand.u32 1, 7
      %p393 = scmp.eq.s32.totalorder %s392, 0
      %p394 = pneg %p393
      // Predicated region
      $region243: #{tpu_custom_call.1} parent=230 // pred_check
        _
      $region244: #{tpu_custom_call.1} parent=230 // pred_check_branch
        %396 = sbr.rel (%p393) target = $region246
      $region245: #{tpu_custom_call.1} parent=230 // pred_region
        %s397 = sand.u32 1, 7
        %s398 = ssub.s32 1, %s397
        %s399 = scalar_lea.vmem %s370, %s398
        %s400 = ssub.s32 1, %s397
        %s401 = scalar_lea.vmem %s371, %s400 [#allocation2]
        %s402 = sshllo.u32 0, %s397
        loop: start=0, step=1, limit=1
        $region247: #{tpu_custom_call.1} parent=245 // loop_pre_header
          _
        $region248: #{tpu_custom_call.1} parent=245 // loop_header
          %s404 = sphi 0, %s408
          %p405 = scmp.ge.s32.totalorder %s404, 1
          %s409 = sphi %s399, %s399
          %s410 = sphi %s401, %s401
        $region249: #{tpu_custom_call.1} parent=245 // loop_header_branch
          %407 = sbr.rel (%p405) target = $region253
        $region250: #{tpu_custom_call.1} parent=245 // loop_body
          %v411 = vld [vmem:[%s409] sm:%s402]
          %412 = vst [vmem:[%s410] sm:%s402] %v411
        $region251: #{tpu_custom_call.1} parent=245 // loop_footer
          %s408 = sadd.s32 1, %s404
        $region252: #{tpu_custom_call.1} parent=245 // loop_footer_branch
          %403 = sbr.rel target = $region248
        $region253: #{tpu_custom_call.1} parent=245 // loop_exit
          _
      $region246: #{tpu_custom_call.1} parent=230 // pred_fallthru
        _
    $region231: #{tpu_custom_call.1} parent=1 // pred_fallthru
      _
    // Predicated region
    $region232: #{tpu_custom_call.1} parent=1 // pred_check
      %p378 = pneg %p374
    $region233: #{tpu_custom_call.1} parent=1 // pred_check_branch
      %380 = sbr.rel (%p378) target = $region235
    $region234: #{tpu_custom_call.1} parent=1 // pred_region
      %s381 = sshllo.u32 0, 1
      loop: start=0, step=1, limit=1
      $region236: #{tpu_custom_call.1} parent=234 // loop_pre_header
        _
      $region237: #{tpu_custom_call.1} parent=234 // loop_header
        %s383 = sphi 0, %s387
        %p384 = scmp.ge.s32.totalorder %s383, 1
        %s388 = sphi %s370, %s370
        %s389 = sphi %s371, %s371
      $region238: #{tpu_custom_call.1} parent=234 // loop_header_branch
        %386 = sbr.rel (%p384) target = $region242
      $region239: #{tpu_custom_call.1} parent=234 // loop_body
        %v390 = vld [vmem:[%s388] sm:%s381]
        %391 = vst [vmem:[%s389] sm:%s381] %v390
      $region240: #{tpu_custom_call.1} parent=234 // loop_footer
        %s387 = sadd.s32 1, %s383
      $region241: #{tpu_custom_call.1} parent=234 // loop_footer_branch
        %382 = sbr.rel target = $region237
      $region242: #{tpu_custom_call.1} parent=234 // loop_exit
        _
    $region235: #{tpu_custom_call.1} parent=1 // pred_fallthru
      _
    // Predicated region
    $region254: #{tpu_custom_call.1} parent=1 // pred_check
      _
    $region255: #{tpu_custom_call.1} parent=1 // pred_check_branch
      %415 = sbr.rel (0) target = $region257
    $region256: #{tpu_custom_call.1} parent=1 // pred_region
      %416 = vsyncadd %s372, 16
    $region257: #{tpu_custom_call.1} parent=1 // pred_fallthru
      _
    %s417 = smul.u32 1, 1
    %s418 = sshll.u32 %s417, 4
    %419 = dma.done [#allocation3], %s418
    %s420 = sshll.u32 %s417, 4
    %421 = dma.done %s78, %s420
    %s422 = sshll.u32 %s417, 4
    %423 = dma.done %s127, %s422
    %s424 = sshll.u32 %s417, 4
    %425 = dma.done %s176, %s424
    %s426 = sshll.u32 %s417, 4
    %427 = dma.done %s225, %s426
    %s428 = sshll.u32 %s417, 4
    %429 = dma.done %s274, %s428
    %s430 = sshll.u32 %s417, 4
    %431 = dma.done %s323, %s430
    %s432 = sshll.u32 %s417, 4
    %433 = dma.done %s372, %s432
    %v434 = vld [vmem:[#allocation2] sm:$0xff]
    %v435 = vpack.c.bf16 %v434, %v434
    %v436 = vld [vmem:[%s2] sm:$0xff]
    %v437 = vld [vmem:[%s2 + $0x8] sm:$0xff]
    %v438 = vld [vmem:[%s2 + $0x10] sm:$0xff]
    %v439 = vld [vmem:[%s2 + $0x18] sm:$0xff]
    %v440 = vld [vmem:[%s3] sm:$0x3]
    %v442 = vlaneseq
    %v443 = vshrl.u32 %v442, 7
    %v444 = vsub.s32 0, %v443
    %v445 = vrot.slane %v440, %v444
    %v446 = vlaneseq
    %v447 = vshrl.u32 %v446, 7
    %v448 = vsub.s32 1, %v447
    %v449 = vrot.slane %v440, %v448
    %v456 = vunpack.c.l.b16 %v436
    %v457 = vunpack.c.h.b16 %v436
    %v458 = vunpack.c.l.b16 %v437
    %v459 = vunpack.c.h.b16 %v437
    %v460 = vunpack.c.l.b16 %v438
    %v461 = vunpack.c.h.b16 %v438
    %v462 = vunpack.c.l.b16 %v439
    %v463 = vunpack.c.h.b16 %v439
    %v464 = vpack.c.b16 %v458, %v456
    %v465 = vpack.c.b16 %v459, %v457
    %v466 = vpack.c.b16 %v462, %v460
    %v467 = vpack.c.b16 %v463, %v461
    %vm472 = vcmask 261120
    %v474 = vsel %vm472, %v435, 0
    %476 = vmatprep.subr.bf16.mxu0 %v465
    %477 = vmatpush1.bf16.msra.mxu0 %v464
    %478 = vmatprep.subr.bf16.mxu0 %v467
    %479 = vmatpush1.bf16.msra.mxu0 %v466
    %480 = vmatprep.subr.bf16.mxu0 0
    %481 = vmatpush1.bf16.msra.mxu0 0
    %482 = vmatprep.subr.bf16.mxu0 0
    %483 = vmatpush1.bf16.msra.mxu0 0
    %484 = vmatprep.subr.bf16.mxu0 0
    %485 = vmatpush1.bf16.msra.mxu0 0
    %486 = vmatprep.subr.bf16.mxu0 0
    %487 = vmatpush1.bf16.msra.mxu0 0
    %488 = vmatprep.subr.bf16.mxu0 0
    %489 = vmatpush1.bf16.msra.mxu0 0
    %490 = vmatprep.subr.bf16.mxu0 0
    %491 = vmatpush1.bf16.msra.mxu0 0
    %492 = vmatprep.subr.bf16.mxu0 0
    %493 = vmatpush1.bf16.msra.mxu0 0
    %494 = vmatprep.subr.bf16.mxu0 0
    %495 = vmatpush1.bf16.msra.mxu0 0
    %496 = vmatprep.subr.bf16.mxu0 0
    %497 = vmatpush1.bf16.msra.mxu0 0
    %498 = vmatprep.subr.bf16.mxu0 0
    %499 = vmatpush1.bf16.msra.mxu0 0
    %500 = vmatprep.subr.bf16.mxu0 0
    %501 = vmatpush1.bf16.msra.mxu0 0
    %502 = vmatprep.subr.bf16.mxu0 0
    %503 = vmatpush1.bf16.msra.mxu0 0
    %504 = vmatprep.subr.bf16.mxu0 0
    %505 = vmatpush1.bf16.msra.mxu0 0
    %506 = vmatprep.subr.bf16.mxu0 0
    %507 = vmatpush1.bf16.msra.mxu0 0
    %508 = vmatprep.mubr.bf16.mxu0 0
    %509 = vmatmul.mubr.bf16.gmra.mrb[0].mxu0 %v474
    %v510 = vpop.f32.mrb[0].mxu0
    %v511 = vadd.f32 %v445, %v510
    %v512 = vpop.f32.mrb[0].mxu0
    %v513 = vadd.f32 %v449, %v512
    %v514 = vpop.f32.mrb[0].mxu0
    %v515 = vpop.f32.mrb[0].mxu0
    %516 = vdwg.mxu0
    %v517 = vxor.u32 %v511, 2147483648
    %v518 = vmul.f32 %v517, 1.442695
    %v519 = vpow.pop %v518
    %v520 = vadd.f32 %v519, 1.0
    %v521 = vrcp.pop %v520
    %v522 = vmul.f32 1.0, %v521
    %v523 = vtanh.pop %v511
    %v524 = vxor.u32 %v513, 2147483648
    %v525 = vmul.f32 %v524, 1.442695
    %v526 = vpow.pop %v525
    %v527 = vadd.f32 %v526, 1.0
    %v528 = vrcp.pop %v527
    %v529 = vmul.f32 1.0, %v528
    %531 = vrot.lane.b32.xlu0 %v523, 64
    %v532 = vpop.permute.xlu0 %531
    %v534 = vmul.f32 %v522, %v532
    %v535 = vtanh.pop %v534
    %v536 = vmul.f32 %v529, %v535
    %v537 = vpack.c.bf16 %v536, %v536
    %v538 = vld [vmem:[%s4] sm:$0xf]
    %v539 = vld [vmem:[%s4 + $0x4] sm:$0xf]
    %v540 = vld [vmem:[%s4 + $0x8] sm:$0xf]
    %v541 = vld [vmem:[%s4 + $0xc] sm:$0xf]
    %v542 = vld [vmem:[%s4 + $0x10] sm:$0xf]
    %v543 = vld [vmem:[%s4 + $0x14] sm:$0xf]
    %v544 = vld [vmem:[%s4 + $0x18] sm:$0xf]
    %v545 = vld [vmem:[%s4 + $0x1c] sm:$0xf]
    %v546 = vld [vmem:[%s5] sm:$0x1]
    %v548 = vlaneseq
    %v549 = vshrl.u32 %v548, 7
    %v550 = vsub.s32 0, %v549
    %v551 = vrot.slane %v546, %v550
    %v561 = vunpack.c.l.b16 %v538
    %v562 = vunpack.c.l.b16 %v539
    %v563 = vunpack.c.l.b16 %v540
    %v564 = vunpack.c.l.b16 %v541
    %v565 = vunpack.c.l.b16 %v542
    %v566 = vunpack.c.l.b16 %v543
    %v567 = vunpack.c.l.b16 %v544
    %v568 = vunpack.c.l.b16 %v545
    %v569 = vpack.c.b16 %v562, %v561
    %v570 = vpack.c.b16 %v564, %v563
    %v571 = vpack.c.b16 %v566, %v565
    %v572 = vpack.c.b16 %v568, %v567
    %vm577 = vcmask 523264
    %v579 = vsel %vm577, %v537, 0
    %581 = vmatprep.subr.bf16.mxu0 0
    %582 = vmatpush1.bf16.msra.mxu0 %v569
    %583 = vmatprep.subr.bf16.mxu0 0
    %584 = vmatpush1.bf16.msra.mxu0 %v570
    %585 = vmatprep.subr.bf16.mxu0 0
    %586 = vmatpush1.bf16.msra.mxu0 %v571
    %587 = vmatprep.subr.bf16.mxu0 0
    %588 = vmatpush1.bf16.msra.mxu0 %v572
    %589 = vmatprep.subr.bf16.mxu0 0
    %590 = vmatpush1.bf16.msra.mxu0 0
    %591 = vmatprep.subr.bf16.mxu0 0
    %592 = vmatpush1.bf16.msra.mxu0 0
    %593 = vmatprep.subr.bf16.mxu0 0
    %594 = vmatpush1.bf16.msra.mxu0 0
    %595 = vmatprep.subr.bf16.mxu0 0
    %596 = vmatpush1.bf16.msra.mxu0 0
    %597 = vmatprep.subr.bf16.mxu0 0
    %598 = vmatpush1.bf16.msra.mxu0 0
    %599 = vmatprep.subr.bf16.mxu0 0
    %600 = vmatpush1.bf16.msra.mxu0 0
    %601 = vmatprep.subr.bf16.mxu0 0
    %602 = vmatpush1.bf16.msra.mxu0 0
    %603 = vmatprep.subr.bf16.mxu0 0
    %604 = vmatpush1.bf16.msra.mxu0 0
    %605 = vmatprep.subr.bf16.mxu0 0
    %606 = vmatpush1.bf16.msra.mxu0 0
    %607 = vmatprep.subr.bf16.mxu0 0
    %608 = vmatpush1.bf16.msra.mxu0 0
    %609 = vmatprep.subr.bf16.mxu0 0
    %610 = vmatpush1.bf16.msra.mxu0 0
    %611 = vmatprep.subr.bf16.mxu0 0
    %612 = vmatpush1.bf16.msra.mxu0 0
    %613 = vmatprep.mubr.bf16.mxu0 0
    %614 = vmatmul.mubr.bf16.gmra.mrb[0].mxu0 %v579
    %v615 = vpop.f32.mrb[0].mxu0
    %v616 = vadd.f32 %v551, %v615
    %v617 = vpop.f32.mrb[0].mxu0
    %v618 = vpop.f32.mrb[0].mxu0
    %v619 = vpop.f32.mrb[0].mxu0
    %620 = vdwg.mxu0
    %621 = vmax.xlane.f32.xlu0 %v616
    %v622 = vpop.xlane.xlu0 %621
    %v623 = vsub.f32 %v616, %v622
    %v624 = vmul.f32 %v623, 1.442695
    %v625 = vpow.pop %v624
    %626 = vadd.xlane.f32.xlu0 %v625
    %v627 = vpop.xlane.xlu0 %626
    %v628 = vlog2.pop %v627
    %v629 = vmul.f32 %v628, 0.6931472
    %v630 = vsub.f32 %v623, %v629
    %631 = vst [vmem:[#allocation6] sm:$0xff] %v630
    // Predicated region
    $region258: #{tpu_custom_call.1} parent=1 // pred_check
      _
    $region259: #{tpu_custom_call.1} parent=1 // pred_check_branch
      %633 = sbr.rel (0) target = $region261
    $region260: #{tpu_custom_call.1} parent=1 // pred_region
      %s635 = ssub.s32 128, 128
      %636 = vsyncadd [#allocation7], %s635
      %s638 = sshll.u32 [#allocation6], 4
      %s639 = int_to_ptr.vmem [resolvable:$true] %s638
      %641 = dma.vmem_to_hbm [thread:$0]  %s639, 128, %s6, [#allocation7]
    $region261: #{tpu_custom_call.1} parent=1 // pred_fallthru
      _
    // Predicated region
    $region262: #{tpu_custom_call.1} parent=1 // pred_check
      _
    $region263: #{tpu_custom_call.1} parent=1 // pred_check_branch
      %643 = sbr.rel (0) target = $region265
    $region264: #{tpu_custom_call.1} parent=1 // pred_region
      %644 = dma.done [#allocation7], 128
    $region265: #{tpu_custom_call.1} parent=1 // pred_fallthru
      _
    %645 = vsyncpa [#allocation7], 1
  %646 = vsyncmov [#allocation3]
  %s647 = vpop.sfrf %646
  %p648 = scmp.eq.s32.totalorder %s647, 0
  %p649 = pneg %p648
  %651 = shalt.err (%p649)
  %s652 = scalar_lea.sflag [#allocation3], 1
  %653 = vsyncmov %s652
  %s654 = vpop.sfrf %653
  %p655 = scmp.eq.s32.totalorder %s654, 0
  %p656 = pneg %p655
  %658 = shalt.err (%p656)
  %s659 = scalar_lea.sflag [#allocation3], 2
  %660 = vsyncmov %s659
  %s661 = vpop.sfrf %660
  %p662 = scmp.eq.s32.totalorder %s661, 0
  %p663 = pneg %p662
  %665 = shalt.err (%p663)
  %s666 = scalar_lea.sflag [#allocation3], 3
  %667 = vsyncmov %s666
  %s668 = vpop.sfrf %667
  %p669 = scmp.eq.s32.totalorder %s668, 0
  %p670 = pneg %p669
  %672 = shalt.err (%p670)
  %s673 = scalar_lea.sflag [#allocation3], 4
  %674 = vsyncmov %s673
  %s675 = vpop.sfrf %674
  %p676 = scmp.eq.s32.totalorder %s675, 0
  %p677 = pneg %p676
  %679 = shalt.err (%p677)
  %s680 = scalar_lea.sflag [#allocation3], 5
  %681 = vsyncmov %s680
  %s682 = vpop.sfrf %681
  %p683 = scmp.eq.s32.totalorder %s682, 0
  %p684 = pneg %p683
  %686 = shalt.err (%p684)
  %s687 = scalar_lea.sflag [#allocation3], 6
  %688 = vsyncmov %s687
  %s689 = vpop.sfrf %688
  %p690 = scmp.eq.s32.totalorder %s689, 0
  %p691 = pneg %p690
  %693 = shalt.err (%p691)
  %s694 = scalar_lea.sflag [#allocation3], 7
  %695 = vsyncmov %s694
  %s696 = vpop.sfrf %695
  %p697 = scmp.eq.s32.totalorder %s696, 0
  %p698 = pneg %p697
  %700 = shalt.err (%p698)

</llo_original>
